<compile_context>
chip_gen: v6e
topology: v6e:2x2x1
jax: 0.10.0
libtpu: 0.0.40
codegen_flags: <defaults>
</compile_context>

<pallas_src>
import functools

import jax
import jax.numpy as jnp
from jax import lax
from jax.experimental import pallas as pl
from jax.experimental.pallas import tpu as pltpu


def _attention_kernel(q_ref, k_ref, v_ref, wo_ref, y_ref, att_ref, ycat_ref, *,
                      heads, head_dim):
    """One query tile: per-head QK^T -> softmax -> att@V, then fused out-projection."""
    H, Dh = heads, head_dim

    att_last = None
    for h in range(H):                                    # H is small -> fully unrolled
        q_h = q_ref[:, h * Dh:(h + 1) * Dh]               # [tq, Dh]  (matmul dtype)
        k_h = k_ref[:, h * Dh:(h + 1) * Dh]               # [T,  Dh]  (resident)
        v_h = v_ref[:, h * Dh:(h + 1) * Dh]               # [T,  Dh]  (resident)

        # energies = Q K^T; the transpose is folded into the contraction (no XLU
        # transpose).  bf16/f32 operands on the MXU, f32 accumulation.
        energies = lax.dot_general(
            q_h, k_h, (((1,), (1,)), ((), ())),
            preferred_element_type=jnp.float32)           # [tq, T]

        # softmax(dim=-1) in f32 on VPU/EUP (no 1/sqrt(Dh) scale — matches PGL-SUM).
        m = jnp.max(energies, axis=-1, keepdims=True)
        p = jnp.exp(energies - m)
        s = jnp.sum(p, axis=-1, keepdims=True)
        if h == H - 1:
            # Externally visible attention (torch keeps only the last head's):
            # exact divide so stored rows sum to 1.
            att = p / s
            att_last = att
        else:
            # Internal heads: approximate EUP reciprocal (free slot).
            att = p * pl.reciprocal(s, approx=True)

        y_h = jnp.dot(att.astype(v_h.dtype), v_h,
                      preferred_element_type=jnp.float32)  # [tq, Dh]
        # Static lane slice of the fused per-tile head buffer.
        ycat_ref[:, h * Dh:(h + 1) * Dh] = y_h

    # Fused out-projection: ONE [tq, H*Dh] @ [H*Dh, D] matmul (full-K MXU tiles)
    # instead of H small K=Dh matmuls plus H-1 full-width adds.
    y = jnp.dot(ycat_ref[...].astype(wo_ref.dtype), wo_ref[...],
                preferred_element_type=jnp.float32)        # [tq, D]

    y_ref[...] = y.astype(y_ref.dtype)
    att_ref[...] = att_last.astype(att_ref.dtype)


def prepare_weights(wq, wk, wv, wout, heads, *, matmul_dtype=jnp.bfloat16):
    """One-time re-layout + cast of torch-style weights (kept OUT of the per-call path).

    wq/wk/wv: [H, Dh, D]  (torch nn.Linear weight layout: [out_features, in_features])
    wout:     [D, H*Dh]   (out projection weight, Linear(output_size -> input_size))
    Returns:
      w_qkv: [D, 3*H*Dh]  columns ordered [Q_h0..Q_h(H-1) | K_... | V_...]
      w_out: [H*Dh, D]    == wout^T, so y = y_cat @ w_out
    """
    H = heads
    _, Dh, D = wq.shape
    wq_f = jnp.transpose(wq, (2, 0, 1)).reshape(D, H * Dh)
    wk_f = jnp.transpose(wk, (2, 0, 1)).reshape(D, H * Dh)
    wv_f = jnp.transpose(wv, (2, 0, 1)).reshape(D, H * Dh)
    w_qkv = jnp.concatenate([wq_f, wk_f, wv_f], axis=1).astype(matmul_dtype)
    w_out = jnp.transpose(wout).astype(matmul_dtype)
    return w_qkv, w_out


def _pick_query_tile(T):
    if T <= 256:
        return T
    for cand in (256, 128, 512, 64):
        if T % cand == 0:
            return cand
    return 256  # non-dividing tile; Pallas masks the boundary block


def self_attention(x, w_qkv, w_out, heads, *, tq=None, interpret=False):
    """PGL-SUM SelfAttention forward.

    x: [T, D] frame features; w_qkv: [D, 3*H*Dh]; w_out: [H*Dh, D] (prepare_weights).
    Returns (y [T, D] f32, att [T, T] f32); att is the LAST head's attention.
    """
    T, D = x.shape
    HD = w_out.shape[0]
    Dh = HD // heads
    mm_dtype = w_qkv.dtype

    # QKV projection hoisted out of the per-query-tile path: one [T,D]@[D,3HD]
    # matmul handled by XLA (the x cast fuses into the dot under jit).  K/V then
    # stay VMEM-resident inside the kernel while the grid walks query tiles.
    qkv = jnp.dot(x.astype(mm_dtype), w_qkv, preferred_element_type=jnp.float32)
    qkv = qkv.astype(mm_dtype)           # compact K/V (halves resident VMEM for bf16)
    q = qkv[:, :HD]
    k = qkv[:, HD:2 * HD]
    v = qkv[:, 2 * HD:]

    if tq is None:
        tq = _pick_query_tile(T)
    tq = min(tq, T)
    grid = (pl.cdiv(T, tq),)

    kernel = functools.partial(_attention_kernel, heads=heads, head_dim=Dh)

    item = jnp.dtype(mm_dtype).itemsize
    # Working-set estimate: resident K/V/W_out (single-buffered) + double-buffered
    # q/y/att tiles + f32 softmax temporaries + the y_cat scratch, with headroom.
    est = (2 * T * HD * item + HD * D * item
           + 2 * tq * HD * item + 2 * tq * D * 4 + 2 * tq * T * 4
           + 3 * tq * T * 4 + 2 * tq * HD * 4)
    vmem_limit = int(min(48 * 1024 * 1024, max(16 * 1024 * 1024, 2 * est)))

    cost = pl.CostEstimate(
        flops=4 * T * T * HD + 2 * T * HD * D,        # QK^T + att@V + out-projection
        transcendentals=heads * T * T,                # exp()
        bytes_accessed=3 * T * HD * item + HD * D * item + T * D * 4 + T * T * 4,
    )

    def build(single_buffer_resident):
        resident = ({"pipeline_mode": pl.Buffered(1)}
                    if single_buffer_resident else {})
        grid_spec = pltpu.PrefetchScalarGridSpec(
            num_scalar_prefetch=0,
            grid=grid,
            in_specs=[
                pl.BlockSpec((tq, HD), lambda i: (i, 0)),              # Q rows (pipelined)
                pl.BlockSpec((T, HD), lambda i: (0, 0), **resident),   # K (resident)
                pl.BlockSpec((T, HD), lambda i: (0, 0), **resident),   # V (resident)
                pl.BlockSpec((HD, D), lambda i: (0, 0), **resident),   # W_out (resident)
            ],
            out_specs=[
                pl.BlockSpec((tq, D), lambda i: (i, 0)),               # y rows
                pl.BlockSpec((tq, T), lambda i: (i, 0)),               # att rows (last head)
            ],
            scratch_shapes=[pltpu.VMEM((tq, HD), jnp.float32)],        # fused y_cat buffer
        )
        return pl.pallas_call(
            kernel,
            out_shape=(jax.ShapeDtypeStruct((T, D), jnp.float32),
                       jax.ShapeDtypeStruct((T, T), jnp.float32)),
            grid_spec=grid_spec,
            compiler_params=pltpu.CompilerParams(
                dimension_semantics=("parallel",),   # query tiles -> megacore on v7x
                vmem_limit_bytes=vmem_limit),
            cost_estimate=cost,
            interpret=interpret,
        )

    try:
        return build(True)(q, k, v, w_out)
    except Exception:
        # Fallback for JAX builds that reject single-buffered (Buffered(1)) block specs.
        return build(False)(q, k, v, w_out)


def _reference(x, wq, wk, wv, wout, heads):
    outs = []
    att = None
    for h in range(heads):
        q = x @ wq[h].T
        k = x @ wk[h].T
        v = x @ wv[h].T
        e = q @ k.T
        att = jax.nn.softmax(e, axis=-1)
        outs.append(att @ v)
    y = jnp.concatenate(outs, axis=1) @ wout.T
    return y, att


def _run_case(*, T, input_size, output_size, heads, matmul_dtype, tq, w_scale,
              atol, rtol, name):
    head_dim = output_size // heads
    key = jax.random.PRNGKey(0)
    kx, kq, kk, kv, ko = jax.random.split(key, 5)

    x = jax.random.normal(kx, (T, input_size), dtype=jnp.float32)
    # nn.Linear(..., bias=False) layout: [out_features, in_features]
    wq = w_scale * jax.random.normal(kq, (heads, head_dim, input_size), dtype=jnp.float32)
    wk = w_scale * jax.random.normal(kk, (heads, head_dim, input_size), dtype=jnp.float32)
    wv = w_scale * jax.random.normal(kv, (heads, head_dim, input_size), dtype=jnp.float32)
    wout = w_scale * jax.random.normal(ko, (input_size, output_size), dtype=jnp.float32)

    # One-time weight re-layout + cast, kept OUT of the per-forward path.
    w_qkv, w_out = prepare_weights(wq, wk, wv, wout, heads, matmul_dtype=matmul_dtype)

    y, att = self_attention(x, w_qkv, w_out, heads, tq=tq)
    jax.block_until_ready((y, att))

    y_ref, att_ref = _reference(x, wq, wk, wv, wout, heads)
    assert jnp.allclose(y, y_ref, atol=atol, rtol=rtol), f"{name}: y mismatch"
    assert jnp.allclose(att, att_ref, atol=atol, rtol=rtol), f"{name}: att mismatch"


if __name__ == "__main__":
    # 1) Small shapes consistent with the module (x is [T, input_size]); default
    #    bf16 MXU-operand path (f32 accumulation + f32 softmax).
    _run_case(T=8, input_size=32, output_size=32, heads=2,
              matmul_dtype=jnp.bfloat16, tq=None, w_scale=0.1,
              atol=2e-2, rtol=2e-2, name="small_bf16")

    # 2) Multi-tile grid (grid=(2,)): exercises query tiling, resident K/V/W_out and
    #    the parallel query axis; f32 MXU path for tight numerics.
    _run_case(T=128, input_size=128, output_size=128, heads=2,
              matmul_dtype=jnp.float32, tq=64, w_scale=0.05,
              atol=5e-3, rtol=5e-3, name="tiled_f32")

    print("KERNEL_OK")
</pallas_src>

<mosaic_0001>
module attributes {stable_mosaic.version = 11 : i64} {
  func.func @_attention_kernel(%arg0: i32, %arg1: memref<8x32xbf16, #tpu.memory_space<vmem>>, %arg2: memref<8x32xbf16, #tpu.memory_space<vmem>>, %arg3: memref<8x32xbf16, #tpu.memory_space<vmem>>, %arg4: memref<32x32xbf16, #tpu.memory_space<vmem>>, %arg5: memref<8x32xf32, #tpu.memory_space<vmem>>, %arg6: memref<8x8xf32, #tpu.memory_space<vmem>>, %arg7: memref<8x32xf32, #tpu.memory_space<vmem>>) attributes {dimension_semantics = [#tpu.dimension_semantics<parallel>], iteration_bounds = array<i64: 1>, scalar_prefetch = 0 : i64, scratch_operands = 1 : i64, tpu.core_type = #tpu.core_type<tc>, window_params = [{transform_indices = @transform_0, window_bounds = array<i64: 8, 32>}, {pipeline_mode = #tpu.pipeline_mode<synchronous>, transform_indices = @transform_1, window_bounds = array<i64: 8, 32>}, {pipeline_mode = #tpu.pipeline_mode<synchronous>, transform_indices = @transform_2, window_bounds = array<i64: 8, 32>}, {pipeline_mode = #tpu.pipeline_mode<synchronous>, transform_indices = @transform_3, window_bounds = array<i64: 32, 32>}, {transform_indices = @transform_4, window_bounds = array<i64: 8, 32>}, {transform_indices = @transform_5, window_bounds = array<i64: 8, 8>}]} {
    %c0 = arith.constant 0 : index
    %c0_0 = arith.constant 0 : index
    %0 = vector.load %arg1[%c0, %c0_0] : memref<8x32xbf16, #tpu.memory_space<vmem>>, vector<8x16xbf16>
    %c0_1 = arith.constant 0 : index
    %c0_2 = arith.constant 0 : index
    %1 = vector.load %arg2[%c0_1, %c0_2] : memref<8x32xbf16, #tpu.memory_space<vmem>>, vector<8x16xbf16>
    %c0_3 = arith.constant 0 : index
    %c0_4 = arith.constant 0 : index
    %2 = vector.load %arg3[%c0_3, %c0_4] : memref<8x32xbf16, #tpu.memory_space<vmem>>, vector<8x16xbf16>
    %cst = arith.constant dense<0.000000e+00> : vector<8x8xf32>
    %3 = tpu.matmul %0, %1, %cst {dimension_numbers = #tpu.dot_dimension_numbers<[1], [1], [0], [0], [0, 0, 1, 0], [], []>} : vector<8x16xbf16>, vector<8x16xbf16>, vector<8x8xf32> -> vector<8x8xf32>
    %cst_5 = arith.constant dense<0xFF800000> : vector<8xf32>
    %4 = vector.multi_reduction <maximumf>, %3, %cst_5 [1] : vector<8x8xf32> to vector<8xf32>
    %5 = vector.shape_cast %4 : vector<8xf32> to vector<8x1xf32>
    %6 = vector.broadcast %5 : vector<8x1xf32> to vector<8x8xf32>
    %7 = arith.subf %3, %6 : vector<8x8xf32>
    %8 = math.exp %7 : vector<8x8xf32>
    %cst_6 = arith.constant dense<0.000000e+00> : vector<8xf32>
    %9 = vector.multi_reduction <add>, %8, %cst_6 [1] : vector<8x8xf32> to vector<8xf32>
    %10 = vector.shape_cast %9 : vector<8xf32> to vector<8x1xf32>
    %11 = tpu.reciprocal %10 {approx = true} : vector<8x1xf32> -> vector<8x1xf32>
    %12 = vector.broadcast %11 : vector<8x1xf32> to vector<8x8xf32>
    %13 = arith.mulf %8, %12 : vector<8x8xf32>
    %14 = arith.truncf %13 : vector<8x8xf32> to vector<8x8xbf16>
    %cst_7 = arith.constant dense<0.000000e+00> : vector<8x16xf32>
    %15 = tpu.matmul %14, %2, %cst_7 {dimension_numbers = #tpu.dot_dimension_numbers<[1], [0], [0], [1], [0, 0, 1, 1], [], []>} : vector<8x8xbf16>, vector<8x16xbf16>, vector<8x16xf32> -> vector<8x16xf32>
    %c0_8 = arith.constant 0 : index
    %c0_9 = arith.constant 0 : index
    %16 = vector.load %arg7[%c0_8, %c0_9] : memref<8x32xf32, #tpu.memory_space<vmem>>, vector<8x16xf32>
    tpu.vector_store %arg7[%c0_8, %c0_9], %15 {strides = array<i32>} : memref<8x32xf32, #tpu.memory_space<vmem>>, vector<8x16xf32>,
    %c0_10 = arith.constant 0 : index
    %c16 = arith.constant 16 : index
    %17 = vector.load %arg1[%c0_10, %c16] : memref<8x32xbf16, #tpu.memory_space<vmem>>, vector<8x16xbf16>
    %c0_11 = arith.constant 0 : index
    %c16_12 = arith.constant 16 : index
    %18 = vector.load %arg2[%c0_11, %c16_12] : memref<8x32xbf16, #tpu.memory_space<vmem>>, vector<8x16xbf16>
    %c0_13 = arith.constant 0 : index
    %c16_14 = arith.constant 16 : index
    %19 = vector.load %arg3[%c0_13, %c16_14] : memref<8x32xbf16, #tpu.memory_space<vmem>>, vector<8x16xbf16>
    %cst_15 = arith.constant dense<0.000000e+00> : vector<8x8xf32>
    %20 = tpu.matmul %17, %18, %cst_15 {dimension_numbers = #tpu.dot_dimension_numbers<[1], [1], [0], [0], [0, 0, 1, 0], [], []>} : vector<8x16xbf16>, vector<8x16xbf16>, vector<8x8xf32> -> vector<8x8xf32>
    %cst_16 = arith.constant dense<0xFF800000> : vector<8xf32>
    %21 = vector.multi_reduction <maximumf>, %20, %cst_16 [1] : vector<8x8xf32> to vector<8xf32>
    %22 = vector.shape_cast %21 : vector<8xf32> to vector<8x1xf32>
    %23 = vector.broadcast %22 : vector<8x1xf32> to vector<8x8xf32>
    %24 = arith.subf %20, %23 : vector<8x8xf32>
    %25 = math.exp %24 : vector<8x8xf32>
    %cst_17 = arith.constant dense<0.000000e+00> : vector<8xf32>
    %26 = vector.multi_reduction <add>, %25, %cst_17 [1] : vector<8x8xf32> to vector<8xf32>
    %27 = vector.shape_cast %26 : vector<8xf32> to vector<8x1xf32>
    %28 = vector.broadcast %27 : vector<8x1xf32> to vector<8x8xf32>
    %29 = arith.divf %25, %28 : vector<8x8xf32>
    %30 = arith.truncf %29 : vector<8x8xf32> to vector<8x8xbf16>
    %cst_18 = arith.constant dense<0.000000e+00> : vector<8x16xf32>
    %31 = tpu.matmul %30, %19, %cst_18 {dimension_numbers = #tpu.dot_dimension_numbers<[1], [0], [0], [1], [0, 0, 1, 1], [], []>} : vector<8x8xbf16>, vector<8x16xbf16>, vector<8x16xf32> -> vector<8x16xf32>
    %c0_19 = arith.constant 0 : index
    %c16_20 = arith.constant 16 : index
    %32 = vector.load %arg7[%c0_19, %c16_20] : memref<8x32xf32, #tpu.memory_space<vmem>>, vector<8x16xf32>
    tpu.vector_store %arg7[%c0_19, %c16_20], %31 {strides = array<i32>} : memref<8x32xf32, #tpu.memory_space<vmem>>, vector<8x16xf32>,
    %c0_21 = arith.constant 0 : index
    %c0_22 = arith.constant 0 : index
    %33 = vector.load %arg7[%c0_21, %c0_22] : memref<8x32xf32, #tpu.memory_space<vmem>>, vector<8x32xf32>
    %34 = arith.truncf %33 : vector<8x32xf32> to vector<8x32xbf16>
    %c0_23 = arith.constant 0 : index
    %c0_24 = arith.constant 0 : index
    %35 = vector.load %arg4[%c0_23, %c0_24] : memref<32x32xbf16, #tpu.memory_space<vmem>>, vector<32x32xbf16>
    %cst_25 = arith.constant dense<0.000000e+00> : vector<8x32xf32>
    %36 = tpu.matmul %34, %35, %cst_25 {dimension_numbers = #tpu.dot_dimension_numbers<[1], [0], [0], [1], [0, 0, 1, 1], [], []>} : vector<8x32xbf16>, vector<32x32xbf16>, vector<8x32xf32> -> vector<8x32xf32>
    %c0_26 = arith.constant 0 : index
    %c0_27 = arith.constant 0 : index
    %37 = vector.load %arg5[%c0_26, %c0_27] : memref<8x32xf32, #tpu.memory_space<vmem>>, vector<8x32xf32>
    tpu.vector_store %arg5[%c0_26, %c0_27], %36 {strides = array<i32>} : memref<8x32xf32, #tpu.memory_space<vmem>>, vector<8x32xf32>,
    %c0_28 = arith.constant 0 : index
    %c0_29 = arith.constant 0 : index
    %38 = vector.load %arg6[%c0_28, %c0_29] : memref<8x8xf32, #tpu.memory_space<vmem>>, vector<8x8xf32>
    tpu.vector_store %arg6[%c0_28, %c0_29], %29 {strides = array<i32>} : memref<8x8xf32, #tpu.memory_space<vmem>>, vector<8x8xf32>,
    return
  }
  func.func @transform_0(%arg0: i32) -> (i32, i32) {
    %c0_i32 = arith.constant 0 : i32
    %c0_i32_0 = arith.constant 0 : i32
    return %arg0, %c0_i32 : i32, i32
  }
  func.func @transform_1(%arg0: i32) -> (i32, i32) {
    %c0_i32 = arith.constant 0 : i32
    %c0_i32_0 = arith.constant 0 : i32
    %c0_i32_1 = arith.constant 0 : i32
    return %c0_i32, %c0_i32_0 : i32, i32
  }
  func.func @transform_2(%arg0: i32) -> (i32, i32) {
    %c0_i32 = arith.constant 0 : i32
    %c0_i32_0 = arith.constant 0 : i32
    %c0_i32_1 = arith.constant 0 : i32
    return %c0_i32, %c0_i32_0 : i32, i32
  }
  func.func @transform_3(%arg0: i32) -> (i32, i32) {
    %c0_i32 = arith.constant 0 : i32
    %c0_i32_0 = arith.constant 0 : i32
    %c0_i32_1 = arith.constant 0 : i32
    return %c0_i32, %c0_i32_0 : i32, i32
  }
  func.func @transform_4(%arg0: i32) -> (i32, i32) {
    %c0_i32 = arith.constant 0 : i32
    %c0_i32_0 = arith.constant 0 : i32
    return %arg0, %c0_i32 : i32, i32
  }
  func.func @transform_5(%arg0: i32) -> (i32, i32) {
    %c0_i32 = arith.constant 0 : i32
    %c0_i32_0 = arith.constant 0 : i32
    return %arg0, %c0_i32 : i32, i32
  }
}

module attributes {stable_mosaic.version = 11 : i64} {
  func.func @_attention_kernel(%arg0: i32, %arg1: memref<8x32xbf16, #tpu.memory_space<vmem>>, %arg2: memref<8x32xbf16, #tpu.memory_space<vmem>>, %arg3: memref<8x32xbf16, #tpu.memory_space<vmem>>, %arg4: memref<32x32xbf16, #tpu.memory_space<vmem>>, %arg5: memref<8x32xf32, #tpu.memory_space<vmem>>, %arg6: memref<8x8xf32, #tpu.memory_space<vmem>>, %arg7: memref<8x32xf32, #tpu.memory_space<vmem>>) attributes {dimension_semantics = [#tpu.dimension_semantics<parallel>], iteration_bounds = array<i64: 1>, scalar_prefetch = 0 : i64, scratch_operands = 1 : i64, tpu.core_type = #tpu.core_type<tc>, window_params = [{transform_indices = @transform_0, window_bounds = array<i64: 8, 32>}, {pipeline_mode = #tpu.pipeline_mode<synchronous>, transform_indices = @transform_1, window_bounds = array<i64: 8, 32>}, {pipeline_mode = #tpu.pipeline_mode<synchronous>, transform_indices = @transform_2, window_bounds = array<i64: 8, 32>}, {pipeline_mode = #tpu.pipeline_mode<synchronous>, transform_indices = @transform_3, window_bounds = array<i64: 32, 32>}, {transform_indices = @transform_4, window_bounds = array<i64: 8, 32>}, {transform_indices = @transform_5, window_bounds = array<i64: 8, 8>}]} {
    %c0 = arith.constant 0 : index
    %c0_0 = arith.constant 0 : index
    %0 = vector.load %arg1[%c0, %c0_0] : memref<8x32xbf16, #tpu.memory_space<vmem>>, vector<8x16xbf16>
    %c0_1 = arith.constant 0 : index
    %c0_2 = arith.constant 0 : index
    %1 = vector.load %arg2[%c0_1, %c0_2] : memref<8x32xbf16, #tpu.memory_space<vmem>>, vector<8x16xbf16>
    %c0_3 = arith.constant 0 : index
    %c0_4 = arith.constant 0 : index
    %2 = vector.load %arg3[%c0_3, %c0_4] : memref<8x32xbf16, #tpu.memory_space<vmem>>, vector<8x16xbf16>
    %cst = arith.constant dense<0.000000e+00> : vector<8x8xf32>
    %3 = tpu.matmul %0, %1, %cst {dimension_numbers = #tpu.dot_dimension_numbers<[1], [1], [0], [0], [0, 0, 1, 0], [], []>} : vector<8x16xbf16>, vector<8x16xbf16>, vector<8x8xf32> -> vector<8x8xf32>
    %cst_5 = arith.constant dense<0xFF800000> : vector<8xf32>
    %4 = vector.multi_reduction <maximumf>, %3, %cst_5 [1] : vector<8x8xf32> to vector<8xf32>
    %5 = vector.shape_cast %4 : vector<8xf32> to vector<8x1xf32>
    %6 = vector.broadcast %5 : vector<8x1xf32> to vector<8x8xf32>
    %7 = arith.subf %3, %6 : vector<8x8xf32>
    %8 = math.exp %7 : vector<8x8xf32>
    %cst_6 = arith.constant dense<0.000000e+00> : vector<8xf32>
    %9 = vector.multi_reduction <add>, %8, %cst_6 [1] : vector<8x8xf32> to vector<8xf32>
    %10 = vector.shape_cast %9 : vector<8xf32> to vector<8x1xf32>
    %11 = tpu.reciprocal %10 {approx = true} : vector<8x1xf32> -> vector<8x1xf32>
    %12 = vector.broadcast %11 : vector<8x1xf32> to vector<8x8xf32>
    %13 = arith.mulf %8, %12 : vector<8x8xf32>
    %14 = arith.truncf %13 : vector<8x8xf32> to vector<8x8xbf16>
    %cst_7 = arith.constant dense<0.000000e+00> : vector<8x16xf32>
    %15 = tpu.matmul %14, %2, %cst_7 {dimension_numbers = #tpu.dot_dimension_numbers<[1], [0], [0], [1], [0, 0, 1, 1], [], []>} : vector<8x8xbf16>, vector<8x16xbf16>, vector<8x16xf32> -> vector<8x16xf32>
    %c0_8 = arith.constant 0 : index
    %c0_9 = arith.constant 0 : index
    %16 = vector.load %arg7[%c0_8, %c0_9] : memref<8x32xf32, #tpu.memory_space<vmem>>, vector<8x16xf32>
    tpu.vector_store %arg7[%c0_8, %c0_9], %15 {strides = array<i32>} : memref<8x32xf32, #tpu.memory_space<vmem>>, vector<8x16xf32>,
    %c0_10 = arith.constant 0 : index
    %c16 = arith.constant 16 : index
    %17 = vector.load %arg1[%c0_10, %c16] : memref<8x32xbf16, #tpu.memory_space<vmem>>, vector<8x16xbf16>
    %c0_11 = arith.constant 0 : index
    %c16_12 = arith.constant 16 : index
    %18 = vector.load %arg2[%c0_11, %c16_12] : memref<8x32xbf16, #tpu.memory_space<vmem>>, vector<8x16xbf16>
    %c0_13 = arith.constant 0 : index
    %c16_14 = arith.constant 16 : index
    %19 = vector.load %arg3[%c0_13, %c16_14] : memref<8x32xbf16, #tpu.memory_space<vmem>>, vector<8x16xbf16>
    %cst_15 = arith.constant dense<0.000000e+00> : vector<8x8xf32>
    %20 = tpu.matmul %17, %18, %cst_15 {dimension_numbers = #tpu.dot_dimension_numbers<[1], [1], [0], [0], [0, 0, 1, 0], [], []>} : vector<8x16xbf16>, vector<8x16xbf16>, vector<8x8xf32> -> vector<8x8xf32>
    %cst_16 = arith.constant dense<0xFF800000> : vector<8xf32>
    %21 = vector.multi_reduction <maximumf>, %20, %cst_16 [1] : vector<8x8xf32> to vector<8xf32>
    %22 = vector.shape_cast %21 : vector<8xf32> to vector<8x1xf32>
    %23 = vector.broadcast %22 : vector<8x1xf32> to vector<8x8xf32>
    %24 = arith.subf %20, %23 : vector<8x8xf32>
    %25 = math.exp %24 : vector<8x8xf32>
    %cst_17 = arith.constant dense<0.000000e+00> : vector<8xf32>
    %26 = vector.multi_reduction <add>, %25, %cst_17 [1] : vector<8x8xf32> to vector<8xf32>
    %27 = vector.shape_cast %26 : vector<8xf32> to vector<8x1xf32>
    %28 = vector.broadcast %27 : vector<8x1xf32> to vector<8x8xf32>
    %29 = arith.divf %25, %28 : vector<8x8xf32>
    %30 = arith.truncf %29 : vector<8x8xf32> to vector<8x8xbf16>
    %cst_18 = arith.constant dense<0.000000e+00> : vector<8x16xf32>
    %31 = tpu.matmul %30, %19, %cst_18 {dimension_numbers = #tpu.dot_dimension_numbers<[1], [0], [0], [1], [0, 0, 1, 1], [], []>} : vector<8x8xbf16>, vector<8x16xbf16>, vector<8x16xf32> -> vector<8x16xf32>
    %c0_19 = arith.constant 0 : index
    %c16_20 = arith.constant 16 : index
    %32 = vector.load %arg7[%c0_19, %c16_20] : memref<8x32xf32, #tpu.memory_space<vmem>>, vector<8x16xf32>
    tpu.vector_store %arg7[%c0_19, %c16_20], %31 {strides = array<i32>} : memref<8x32xf32, #tpu.memory_space<vmem>>, vector<8x16xf32>,
    %c0_21 = arith.constant 0 : index
    %c0_22 = arith.constant 0 : index
    %33 = vector.load %arg7[%c0_21, %c0_22] : memref<8x32xf32, #tpu.memory_space<vmem>>, vector<8x32xf32>
    %34 = arith.truncf %33 : vector<8x32xf32> to vector<8x32xbf16>
    %c0_23 = arith.constant 0 : index
    %c0_24 = arith.constant 0 : index
    %35 = vector.load %arg4[%c0_23, %c0_24] : memref<32x32xbf16, #tpu.memory_space<vmem>>, vector<32x32xbf16>
    %cst_25 = arith.constant dense<0.000000e+00> : vector<8x32xf32>
    %36 = tpu.matmul %34, %35, %cst_25 {dimension_numbers = #tpu.dot_dimension_numbers<[1], [0], [0], [1], [0, 0, 1, 1], [], []>} : vector<8x32xbf16>, vector<32x32xbf16>, vector<8x32xf32> -> vector<8x32xf32>
    %c0_26 = arith.constant 0 : index
    %c0_27 = arith.constant 0 : index
    %37 = vector.load %arg5[%c0_26, %c0_27] : memref<8x32xf32, #tpu.memory_space<vmem>>, vector<8x32xf32>
    tpu.vector_store %arg5[%c0_26, %c0_27], %36 {strides = array<i32>} : memref<8x32xf32, #tpu.memory_space<vmem>>, vector<8x32xf32>,
    %c0_28 = arith.constant 0 : index
    %c0_29 = arith.constant 0 : index
    %38 = vector.load %arg6[%c0_28, %c0_29] : memref<8x8xf32, #tpu.memory_space<vmem>>, vector<8x8xf32>
    tpu.vector_store %arg6[%c0_28, %c0_29], %29 {strides = array<i32>} : memref<8x8xf32, #tpu.memory_space<vmem>>, vector<8x8xf32>,
    return
  }
  func.func @transform_0(%arg0: i32) -> (i32, i32) {
    %c0_i32 = arith.constant 0 : i32
    %c0_i32_0 = arith.constant 0 : i32
    return %arg0, %c0_i32 : i32, i32
  }
  func.func @transform_1(%arg0: i32) -> (i32, i32) {
    %c0_i32 = arith.constant 0 : i32
    %c0_i32_0 = arith.constant 0 : i32
    %c0_i32_1 = arith.constant 0 : i32
    return %c0_i32, %c0_i32_0 : i32, i32
  }
  func.func @transform_2(%arg0: i32) -> (i32, i32) {
    %c0_i32 = arith.constant 0 : i32
    %c0_i32_0 = arith.constant 0 : i32
    %c0_i32_1 = arith.constant 0 : i32
    return %c0_i32, %c0_i32_0 : i32, i32
  }
  func.func @transform_3(%arg0: i32) -> (i32, i32) {
    %c0_i32 = arith.constant 0 : i32
    %c0_i32_0 = arith.constant 0 : i32
    %c0_i32_1 = arith.constant 0 : i32
    return %c0_i32, %c0_i32_0 : i32, i32
  }
  func.func @transform_4(%arg0: i32) -> (i32, i32) {
    %c0_i32 = arith.constant 0 : i32
    %c0_i32_0 = arith.constant 0 : i32
    return %arg0, %c0_i32 : i32, i32
  }
  func.func @transform_5(%arg0: i32) -> (i32, i32) {
    %c0_i32 = arith.constant 0 : i32
    %c0_i32_0 = arith.constant 0 : i32
    return %arg0, %c0_i32 : i32, i32
  }
}

</mosaic_0001>

<llo_original>
// kernel: tpu_custom_call.1
$region0: #{tpu_custom_call.1}
  #allocation0 [shape = 'u32[]', space=smem, size = 0x4, offset = 0x4, fixed_abs, tag = 'smem constant byte address 0x4 - core index']
  #allocation1 [shape = 'u32[144,128]{1,0:T(1,128)}', space=vmem, size = 0x12000, scoped, tag = 'internal scratch']
  #allocation2 [shape = 'f32[8,32]{1,0:T(8,128)}', space=vmem, size = 0x1000, scoped, tag = 'scratch operand']
  %s0 = inlined_call_operand.hbm [shape: bf16[8,32], index: 0, kind: input, shape index: {}]
  %s1 = inlined_call_operand.hbm [shape: bf16[8,32], index: 1, kind: input, shape index: {}]
  %s2 = inlined_call_operand.hbm [shape: bf16[8,32], index: 2, kind: input, shape index: {}]
  %s3 = inlined_call_operand.hbm [shape: bf16[32,32], index: 3, kind: input, shape index: {}]
  %s4 = inlined_call_operand.hbm [shape: f32[8,32], index: 4, kind: output, shape index: {0}]
  %s5 = inlined_call_operand.hbm [shape: f32[8,8], index: 5, kind: output, shape index: {1}]
  %6 = xla_tuple %s4, %s5
  %s7 = sld [smem:[#allocation0]]
  $region50: #{tpu_custom_call.1} parent=0
    _
  %s9 = ssub.s32 1, %s7
  %s10 = scalar_select 0, %s9, %s7
  $region1: #{tpu_custom_call.1} parent=0
    #allocation3 [shape = 'u8[2048]{0}', space=vmem, size = 0x800, scoped, tag = 'input window, operand 0, single buffered']
    #allocation4 [shape = 's32[1]{0}', space=sflag, size = 0x4, scoped, tag = 'scoped memory for tpu_custom_call.1']
    #allocation5 [shape = 's32[1]{0}', space=sflag, size = 0x4, scoped, tag = 'scoped memory for tpu_custom_call.1']
    #allocation6 [shape = 'u8[2048]{0}', space=vmem, size = 0x800, scoped, tag = 'input window, operand 1, single buffered']
    #allocation7 [shape = 's32[1]{0}', space=sflag, size = 0x4, scoped, tag = 'scoped memory for tpu_custom_call.1']
    #allocation8 [shape = 'u8[2048]{0}', space=vmem, size = 0x800, scoped, tag = 'input window, operand 2, single buffered']
    #allocation9 [shape = 'u8[8192]{0}', space=vmem, size = 0x2000, scoped, tag = 'input window, operand 3, single buffered']
    #allocation10 [shape = 's32[1]{0}', space=sflag, size = 0x4, scoped, tag = 'scoped memory for tpu_custom_call.1']
    #allocation11 [shape = 'u8[4096]{0}', space=vmem, size = 0x1000, scoped, tag = 'output window, operand 0, single buffered']
    #allocation12 [shape = 'u8[4096]{0}', space=vmem, size = 0x1000, scoped, tag = 'output window, operand 1, single buffered']
    #allocation13 [shape = 's32[1]{0}', space=sflag, size = 0x4, scoped, tag = 'scoped memory for tpu_custom_call.1']
    %11 = vsyncpa [#allocation4], 0
    %12 = vsyncpa [#allocation7], 0
    %13 = vsyncpa [#allocation10], 0
    %14 = vsyncpa [#allocation5], 0
    %15 = vsyncpa [#allocation13], 0
    // Predicated region
    $region2: #{tpu_custom_call.1} parent=1 // pred_check
      _
    $region3: #{tpu_custom_call.1} parent=1 // pred_check_branch
      %17 = sbr.rel (0) target = $region5
    $region4: #{tpu_custom_call.1} parent=1 // pred_region
      %s19 = ssub.s32 64, 64
      %20 = vsyncadd [#allocation4], %s19
      %s22 = sshll.u32 [#allocation3], 4
      %s23 = int_to_ptr.vmem [resolvable:$true] %s22
      %25 = dma.hbm_to_vmem [thread:$0]  %s0, 64, %s23, [#allocation4]
    $region5: #{tpu_custom_call.1} parent=1 // pred_fallthru
      _
    // Predicated region
    $region6: #{tpu_custom_call.1} parent=1 // pred_check
      _
    $region7: #{tpu_custom_call.1} parent=1 // pred_check_branch
      %27 = sbr.rel (0) target = $region9
    $region8: #{tpu_custom_call.1} parent=1 // pred_region
      %s29 = ssub.s32 64, 64
      %30 = vsyncadd [#allocation7], %s29
      %s32 = sshll.u32 [#allocation6], 4
      %s33 = int_to_ptr.vmem [resolvable:$true] %s32
      %35 = dma.hbm_to_vmem [thread:$0]  %s1, 64, %s33, [#allocation7]
    $region9: #{tpu_custom_call.1} parent=1 // pred_fallthru
      _
    // Predicated region
    $region10: #{tpu_custom_call.1} parent=1 // pred_check
      _
    $region11: #{tpu_custom_call.1} parent=1 // pred_check_branch
      %37 = sbr.rel (0) target = $region13
    $region12: #{tpu_custom_call.1} parent=1 // pred_region
      %s39 = ssub.s32 64, 64
      %40 = vsyncadd [#allocation7], %s39
      %s42 = sshll.u32 [#allocation8], 4
      %s43 = int_to_ptr.vmem [resolvable:$true] %s42
      %45 = dma.hbm_to_vmem [thread:$0]  %s2, 64, %s43, [#allocation7]
    $region13: #{tpu_custom_call.1} parent=1 // pred_fallthru
      _
    // Predicated region
    $region14: #{tpu_custom_call.1} parent=1 // pred_check
      _
    $region15: #{tpu_custom_call.1} parent=1 // pred_check_branch
      %47 = sbr.rel (0) target = $region17
    $region16: #{tpu_custom_call.1} parent=1 // pred_region
      %s49 = ssub.s32 256, 256
      %50 = vsyncadd [#allocation10], %s49
      %s51 = sshll.u32 [#allocation9], 4
      %s52 = int_to_ptr.vmem [resolvable:$true] %s51
      %57 = dma.hbm_to_vmem [thread:$0]  %s3, 256, %s52, [#allocation10], 64, 64, 4
    $region17: #{tpu_custom_call.1} parent=1 // pred_fallthru
      _
    // Predicated region
    $region18: #{tpu_custom_call.1} parent=1 // pred_check
      _
    $region19: #{tpu_custom_call.1} parent=1 // pred_check_branch
      %59 = sbr.rel (0) target = $region21
    $region20: #{tpu_custom_call.1} parent=1 // pred_region
      %60 = dma.done [#allocation4], 64
    $region21: #{tpu_custom_call.1} parent=1 // pred_fallthru
      _
    // Predicated region
    $region22: #{tpu_custom_call.1} parent=1 // pred_check
      _
    $region23: #{tpu_custom_call.1} parent=1 // pred_check_branch
      %62 = sbr.rel (0) target = $region25
    $region24: #{tpu_custom_call.1} parent=1 // pred_region
      %63 = dma.done [#allocation7], 64
    $region25: #{tpu_custom_call.1} parent=1 // pred_fallthru
      _
    // Predicated region
    $region26: #{tpu_custom_call.1} parent=1 // pred_check
      _
    $region27: #{tpu_custom_call.1} parent=1 // pred_check_branch
      %65 = sbr.rel (0) target = $region29
    $region28: #{tpu_custom_call.1} parent=1 // pred_region
      %66 = dma.done [#allocation7], 64
    $region29: #{tpu_custom_call.1} parent=1 // pred_fallthru
      _
    // Predicated region
    $region30: #{tpu_custom_call.1} parent=1 // pred_check
      _
    $region31: #{tpu_custom_call.1} parent=1 // pred_check_branch
      %68 = sbr.rel (0) target = $region33
    $region32: #{tpu_custom_call.1} parent=1 // pred_region
      %69 = dma.done [#allocation10], 256
    $region33: #{tpu_custom_call.1} parent=1 // pred_fallthru
      _
    %v71 = vld [vmem:[#allocation3] sm:$0xf]
    %v72 = vld [vmem:[#allocation6] sm:$0xf]
    %v73 = vld [vmem:[#allocation8] sm:$0xf]
    %vm74 = vcmask 130048
    %v76 = vsel %vm74, %v71, 0
    %v79 = vsel %vm74, %v72, 0
    %81 = vmatprep.subr.bf16.mxu0 0
    %82 = vmatpush1.bf16.xpose.msra.mxu0 0
    %83 = vmatprep.subr.bf16.mxu0 0
    %84 = vmatpush1.bf16.xpose.msra.mxu0 0
    %85 = vmatprep.subr.bf16.mxu0 0
    %86 = vmatpush1.bf16.xpose.msra.mxu0 0
    %87 = vmatprep.subr.bf16.mxu0 0
    %88 = vmatpush1.bf16.xpose.msra.mxu0 0
    %89 = vmatprep.subr.bf16.mxu0 0
    %90 = vmatpush1.bf16.xpose.msra.mxu0 0
    %91 = vmatprep.subr.bf16.mxu0 0
    %92 = vmatpush1.bf16.xpose.msra.mxu0 0
    %93 = vmatprep.subr.bf16.mxu0 0
    %94 = vmatpush1.bf16.xpose.msra.mxu0 0
    %95 = vmatprep.subr.bf16.mxu0 0
    %96 = vmatpush1.bf16.xpose.msra.mxu0 %v79
    %97 = vmatprep.subr.bf16.mxu0 0
    %98 = vmatpush2.bf16.xpose.msra.mxu0 0
    %99 = vmatprep.subr.bf16.mxu0 0
    %100 = vmatpush2.bf16.xpose.msra.mxu0 0
    %101 = vmatprep.subr.bf16.mxu0 0
    %102 = vmatpush2.bf16.xpose.msra.mxu0 0
    %103 = vmatprep.subr.bf16.mxu0 0
    %104 = vmatpush2.bf16.xpose.msra.mxu0 0
    %105 = vmatprep.subr.bf16.mxu0 0
    %106 = vmatpush2.bf16.xpose.msra.mxu0 0
    %107 = vmatprep.subr.bf16.mxu0 0
    %108 = vmatpush2.bf16.xpose.msra.mxu0 0
    %109 = vmatprep.subr.bf16.mxu0 0
    %110 = vmatpush2.bf16.xpose.msra.mxu0 0
    %111 = vmatprep.subr.bf16.mxu0 0
    %112 = vmatpush2.bf16.xpose.msra.mxu0 0
    %113 = vmatprep.mubr.bf16.mxu0 0
    %114 = vmatmul.mubr.bf16.gmra.mxu0 %v76
    %v115 = vpop.f32.mrf.mxu0
    %v116 = vadd.f32 0.0, %v115
    %v117 = vpop.f32.mrf.mxu0
    %v118 = vpop.f32.mrf.mxu0
    %v119 = vpop.f32.mrf.mxu0
    %120 = vdwg.mxu0
    %vm121 = vcmask 64512
    %v122 = vsel %vm121, %v116, -inf
    %123 = vmax.xlane.f32.xlu0 %v122
    %v124 = vpop.xlane.xlu0 %123
    %v125 = vsub.f32 %v116, %v124
    %v126 = vmul.f32 %v125, 1.442695
    %v127 = vpow.pop %v126
    %v128 = vsel %vm121, %v127, 0.0
    %129 = vadd.xlane.f32.xlu0 %v128
    %v130 = vpop.xlane.xlu0 %129
    %v131 = vrcp.pop %v130
    %v132 = vmul.f32 %v127, %v131
    %v133 = vpack.c.bf16 %v132, %v132
    %v135 = vsel %vm121, %v133, 0
    %vm137 = vcmask 1043456
    %v139 = vsel %vm137, %v73, 0
    %141 = vmatprep.subr.bf16.mxu0 0
    %142 = vmatpush1.bf16.msra.mxu0 0
    %143 = vmatprep.subr.bf16.mxu0 0
    %144 = vmatpush1.bf16.msra.mxu0 0
    %145 = vmatprep.subr.bf16.mxu0 0
    %146 = vmatpush1.bf16.msra.mxu0 0
    %147 = vmatprep.subr.bf16.mxu0 0
    %148 = vmatpush1.bf16.msra.mxu0 0
    %149 = vmatprep.subr.bf16.mxu0 0
    %150 = vmatpush1.bf16.msra.mxu0 0
    %151 = vmatprep.subr.bf16.mxu0 0
    %152 = vmatpush1.bf16.msra.mxu0 0
    %153 = vmatprep.subr.bf16.mxu0 0
    %154 = vmatpush1.bf16.msra.mxu0 0
    %155 = vmatprep.subr.bf16.mxu0 0
    %156 = vmatpush1.bf16.msra.mxu0 %v139
    %157 = vmatprep.subr.bf16.mxu0 0
    %158 = vmatpush2.bf16.msra.mxu0 0
    %159 = vmatprep.subr.bf16.mxu0 0
    %160 = vmatpush2.bf16.msra.mxu0 0
    %161 = vmatprep.subr.bf16.mxu0 0
    %162 = vmatpush2.bf16.msra.mxu0 0
    %163 = vmatprep.subr.bf16.mxu0 0
    %164 = vmatpush2.bf16.msra.mxu0 0
    %165 = vmatprep.subr.bf16.mxu0 0
    %166 = vmatpush2.bf16.msra.mxu0 0
    %167 = vmatprep.subr.bf16.mxu0 0
    %168 = vmatpush2.bf16.msra.mxu0 0
    %169 = vmatprep.subr.bf16.mxu0 0
    %170 = vmatpush2.bf16.msra.mxu0 0
    %171 = vmatprep.subr.bf16.mxu0 0
    %172 = vmatpush2.bf16.msra.mxu0 0
    %173 = vmatprep.mubr.bf16.mxu0 0
    %174 = vmatmul.mubr.bf16.gmra.mxu0 %v135
    %v175 = vpop.f32.mrf.mxu0
    %v176 = vadd.f32 0.0, %v175
    %v177 = vpop.f32.mrf.mxu0
    %v178 = vpop.f32.mrf.mxu0
    %v179 = vpop.f32.mrf.mxu0
    %180 = vdwg.mxu0
    %181 = vst.msk [vmem:[#allocation2] sm:$0xff] %vm74, %v176
    %v182 = vld [vmem:[#allocation3] sm:$0xf]
    %v183 = vld [vmem:[#allocation6] sm:$0xf]
    %v184 = vld [vmem:[#allocation8] sm:$0xf]
    %v186 = vunpack.c.l.b16 %v182
    %v187 = vpack.c.b16 %v186, %v186
    %188 = vrot.lane.b32.xlu0 %v187, 112
    %v189 = vpop.permute.xlu0 %188
    %v191 = vunpack.c.l.b16 %v183
    %v192 = vpack.c.b16 %v191, %v191
    %193 = vrot.lane.b32.xlu0 %v192, 112
    %v194 = vpop.permute.xlu0 %193
    %v196 = vsel %vm74, %v189, 0
    %v199 = vsel %vm74, %v194, 0
    %201 = vmatprep.subr.bf16.mxu0 0
    %202 = vmatpush1.bf16.xpose.msra.mxu0 0
    %203 = vmatprep.subr.bf16.mxu0 0
    %204 = vmatpush1.bf16.xpose.msra.mxu0 0
    %205 = vmatprep.subr.bf16.mxu0 0
    %206 = vmatpush1.bf16.xpose.msra.mxu0 0
    %207 = vmatprep.subr.bf16.mxu0 0
    %208 = vmatpush1.bf16.xpose.msra.mxu0 0
    %209 = vmatprep.subr.bf16.mxu0 0
    %210 = vmatpush1.bf16.xpose.msra.mxu0 0
    %211 = vmatprep.subr.bf16.mxu0 0
    %212 = vmatpush1.bf16.xpose.msra.mxu0 0
    %213 = vmatprep.subr.bf16.mxu0 0
    %214 = vmatpush1.bf16.xpose.msra.mxu0 0
    %215 = vmatprep.subr.bf16.mxu0 0
    %216 = vmatpush1.bf16.xpose.msra.mxu0 %v199
    %217 = vmatprep.subr.bf16.mxu0 0
    %218 = vmatpush2.bf16.xpose.msra.mxu0 0
    %219 = vmatprep.subr.bf16.mxu0 0
    %220 = vmatpush2.bf16.xpose.msra.mxu0 0
    %221 = vmatprep.subr.bf16.mxu0 0
    %222 = vmatpush2.bf16.xpose.msra.mxu0 0
    %223 = vmatprep.subr.bf16.mxu0 0
    %224 = vmatpush2.bf16.xpose.msra.mxu0 0
    %225 = vmatprep.subr.bf16.mxu0 0
    %226 = vmatpush2.bf16.xpose.msra.mxu0 0
    %227 = vmatprep.subr.bf16.mxu0 0
    %228 = vmatpush2.bf16.xpose.msra.mxu0 0
    %229 = vmatprep.subr.bf16.mxu0 0
    %230 = vmatpush2.bf16.xpose.msra.mxu0 0
    %231 = vmatprep.subr.bf16.mxu0 0
    %232 = vmatpush2.bf16.xpose.msra.mxu0 0
    %233 = vmatprep.mubr.bf16.mxu0 0
    %234 = vmatmul.mubr.bf16.gmra.mxu0 %v196
    %v235 = vpop.f32.mrf.mxu0
    %v236 = vadd.f32 0.0, %v235
    %v237 = vpop.f32.mrf.mxu0
    %v238 = vpop.f32.mrf.mxu0
    %v239 = vpop.f32.mrf.mxu0
    %240 = vdwg.mxu0
    %v241 = vsel %vm121, %v236, -inf
    %242 = vmax.xlane.f32.xlu0 %v241
    %v243 = vpop.xlane.xlu0 %242
    %v244 = vsub.f32 %v236, %v243
    %v245 = vmul.f32 %v244, 1.442695
    %v246 = vpow.pop %v245
    %v247 = vsel %vm121, %v246, 0.0
    %248 = vadd.xlane.f32.xlu0 %v247
    %v249 = vpop.xlane.xlu0 %248
    %v250 = vrcp.pop %v249
    %v251 = vmul.f32 %v246, %v250
    %v252 = vpack.c.bf16 %v251, %v251
    %v254 = vunpack.c.l.b16 %v184
    %v255 = vpack.c.b16 %v254, %v254
    %256 = vrot.lane.b32.xlu0 %v255, 112
    %v257 = vpop.permute.xlu0 %256
    %v259 = vsel %vm121, %v252, 0
    %v262 = vsel %vm137, %v257, 0
    %264 = vmatprep.subr.bf16.mxu0 0
    %265 = vmatpush1.bf16.msra.mxu0 0
    %266 = vmatprep.subr.bf16.mxu0 0
    %267 = vmatpush1.bf16.msra.mxu0 0
    %268 = vmatprep.subr.bf16.mxu0 0
    %269 = vmatpush1.bf16.msra.mxu0 0
    %270 = vmatprep.subr.bf16.mxu0 0
    %271 = vmatpush1.bf16.msra.mxu0 0
    %272 = vmatprep.subr.bf16.mxu0 0
    %273 = vmatpush1.bf16.msra.mxu0 0
    %274 = vmatprep.subr.bf16.mxu0 0
    %275 = vmatpush1.bf16.msra.mxu0 0
    %276 = vmatprep.subr.bf16.mxu0 0
    %277 = vmatpush1.bf16.msra.mxu0 0
    %278 = vmatprep.subr.bf16.mxu0 0
    %279 = vmatpush1.bf16.msra.mxu0 %v262
    %280 = vmatprep.subr.bf16.mxu0 0
    %281 = vmatpush2.bf16.msra.mxu0 0
    %282 = vmatprep.subr.bf16.mxu0 0
    %283 = vmatpush2.bf16.msra.mxu0 0
    %284 = vmatprep.subr.bf16.mxu0 0
    %285 = vmatpush2.bf16.msra.mxu0 0
    %286 = vmatprep.subr.bf16.mxu0 0
    %287 = vmatpush2.bf16.msra.mxu0 0
    %288 = vmatprep.subr.bf16.mxu0 0
    %289 = vmatpush2.bf16.msra.mxu0 0
    %290 = vmatprep.subr.bf16.mxu0 0
    %291 = vmatpush2.bf16.msra.mxu0 0
    %292 = vmatprep.subr.bf16.mxu0 0
    %293 = vmatpush2.bf16.msra.mxu0 0
    %294 = vmatprep.subr.bf16.mxu0 0
    %295 = vmatpush2.bf16.msra.mxu0 0
    %296 = vmatprep.mubr.bf16.mxu0 0
    %297 = vmatmul.mubr.bf16.gmra.mxu0 %v259
    %v298 = vpop.f32.mrf.mxu0
    %v299 = vadd.f32 0.0, %v298
    %v300 = vpop.f32.mrf.mxu0
    %v301 = vpop.f32.mrf.mxu0
    %v302 = vpop.f32.mrf.mxu0
    %303 = vdwg.mxu0
    %305 = vrot.lane.b32.xlu0 %v299, 16
    %v306 = vpop.permute.xlu0 %305
    %vm308 = vcmask 261248
    %309 = vst.msk [vmem:[#allocation2] sm:$0xff] %vm308, %v306
    %v310 = vld [vmem:[#allocation2] sm:$0xff]
    %v311 = vpack.c.bf16 %v310, %v310
    %v312 = vld [vmem:[#allocation9] sm:$0xf]
    %v313 = vld [vmem:[#allocation9 + $0x4] sm:$0xf]
    %v314 = vld [vmem:[#allocation9 + $0x8] sm:$0xf]
    %v315 = vld [vmem:[#allocation9 + $0xc] sm:$0xf]
    %v320 = vunpack.c.l.b16 %v312
    %v321 = vunpack.c.l.b16 %v313
    %v322 = vunpack.c.l.b16 %v314
    %v323 = vunpack.c.l.b16 %v315
    %v324 = vpack.c.b16 %v321, %v320
    %v325 = vpack.c.b16 %v323, %v322
    %vm328 = vcmask 261120
    %v330 = vsel %vm328, %v311, 0
    %332 = vmatprep.subr.bf16.mxu0 0
    %333 = vmatpush1.bf16.msra.mxu0 0
    %334 = vmatprep.subr.bf16.mxu0 0
    %335 = vmatpush1.bf16.msra.mxu0 0
    %336 = vmatprep.subr.bf16.mxu0 0
    %337 = vmatpush1.bf16.msra.mxu0 0
    %338 = vmatprep.subr.bf16.mxu0 0
    %339 = vmatpush1.bf16.msra.mxu0 0
    %340 = vmatprep.subr.bf16.mxu0 0
    %341 = vmatpush1.bf16.msra.mxu0 0
    %342 = vmatprep.subr.bf16.mxu0 0
    %343 = vmatpush1.bf16.msra.mxu0 0
    %344 = vmatprep.subr.bf16.mxu0 0
    %345 = vmatpush1.bf16.msra.mxu0 %v325
    %346 = vmatprep.subr.bf16.mxu0 0
    %347 = vmatpush1.bf16.msra.mxu0 %v324
    %348 = vmatprep.subr.bf16.mxu0 0
    %349 = vmatpush2.bf16.msra.mxu0 0
    %350 = vmatprep.subr.bf16.mxu0 0
    %351 = vmatpush2.bf16.msra.mxu0 0
    %352 = vmatprep.subr.bf16.mxu0 0
    %353 = vmatpush2.bf16.msra.mxu0 0
    %354 = vmatprep.subr.bf16.mxu0 0
    %355 = vmatpush2.bf16.msra.mxu0 0
    %356 = vmatprep.subr.bf16.mxu0 0
    %357 = vmatpush2.bf16.msra.mxu0 0
    %358 = vmatprep.subr.bf16.mxu0 0
    %359 = vmatpush2.bf16.msra.mxu0 0
    %360 = vmatprep.subr.bf16.mxu0 0
    %361 = vmatpush2.bf16.msra.mxu0 0
    %362 = vmatprep.subr.bf16.mxu0 0
    %363 = vmatpush2.bf16.msra.mxu0 0
    %364 = vmatprep.mubr.bf16.mxu0 0
    %365 = vmatmul.mubr.bf16.gmra.mxu0 %v330
    %v366 = vpop.f32.mrf.mxu0
    %v367 = vadd.f32 0.0, %v366
    %v368 = vpop.f32.mrf.mxu0
    %v369 = vpop.f32.mrf.mxu0
    %v370 = vpop.f32.mrf.mxu0
    %371 = vdwg.mxu0
    %372 = vst.msk [vmem:[#allocation11] sm:$0xff] %vm328, %v367
    %373 = vst.msk [vmem:[#allocation12] sm:$0xff] %vm121, %v251
    // Predicated region
    $region34: #{tpu_custom_call.1} parent=1 // pred_check
      _
    $region35: #{tpu_custom_call.1} parent=1 // pred_check_branch
      %375 = sbr.rel (0) target = $region37
    $region36: #{tpu_custom_call.1} parent=1 // pred_region
      %s377 = ssub.s32 128, 128
      %378 = vsyncadd [#allocation5], %s377
      %s380 = sshll.u32 [#allocation11], 4
      %s381 = int_to_ptr.vmem [resolvable:$true] %s380
      %383 = dma.vmem_to_hbm [thread:$0]  %s381, 128, %s4, [#allocation5]
    $region37: #{tpu_custom_call.1} parent=1 // pred_fallthru
      _
    // Predicated region
    $region38: #{tpu_custom_call.1} parent=1 // pred_check
      _
    $region39: #{tpu_custom_call.1} parent=1 // pred_check_branch
      %385 = sbr.rel (0) target = $region41
    $region40: #{tpu_custom_call.1} parent=1 // pred_region
      %s387 = ssub.s32 128, 128
      %388 = vsyncadd [#allocation13], %s387
      %s390 = sshll.u32 [#allocation12], 4
      %s391 = int_to_ptr.vmem [resolvable:$true] %s390
      %393 = dma.vmem_to_hbm [thread:$0]  %s391, 128, %s5, [#allocation13]
    $region41: #{tpu_custom_call.1} parent=1 // pred_fallthru
      _
    // Predicated region
    $region42: #{tpu_custom_call.1} parent=1 // pred_check
      _
    $region43: #{tpu_custom_call.1} parent=1 // pred_check_branch
      %395 = sbr.rel (0) target = $region45
    $region44: #{tpu_custom_call.1} parent=1 // pred_region
      %396 = dma.done [#allocation5], 128
    $region45: #{tpu_custom_call.1} parent=1 // pred_fallthru
      _
    // Predicated region
    $region46: #{tpu_custom_call.1} parent=1 // pred_check
      _
    $region47: #{tpu_custom_call.1} parent=1 // pred_check_branch
      %398 = sbr.rel (0) target = $region49
    $region48: #{tpu_custom_call.1} parent=1 // pred_region
      %399 = dma.done [#allocation13], 128
    $region49: #{tpu_custom_call.1} parent=1 // pred_fallthru
      _
    %400 = vsyncpa [#allocation4], 1
    %401 = vsyncpa [#allocation7], 1
    %402 = vsyncpa [#allocation10], 1
    %403 = vsyncpa [#allocation5], 1
    %404 = vsyncpa [#allocation13], 1

// kernel: tpu_custom_call.1
$region0: #{tpu_custom_call.1}
  #allocation0 [shape = 'u32[]', space=smem, size = 0x4, offset = 0x4, fixed_abs, tag = 'smem constant byte address 0x4 - core index']
  #allocation1 [shape = 'u32[144,128]{1,0:T(1,128)}', space=vmem, size = 0x12000, scoped, tag = 'internal scratch']
  #allocation2 [shape = 'f32[8,32]{1,0:T(8,128)}', space=vmem, size = 0x1000, scoped, tag = 'scratch operand']
  %s0 = inlined_call_operand.hbm [shape: bf16[8,32], index: 0, kind: input, shape index: {}]
  %s1 = inlined_call_operand.hbm [shape: bf16[8,32], index: 1, kind: input, shape index: {}]
  %s2 = inlined_call_operand.hbm [shape: bf16[8,32], index: 2, kind: input, shape index: {}]
  %s3 = inlined_call_operand.hbm [shape: bf16[32,32], index: 3, kind: input, shape index: {}]
  %s4 = inlined_call_operand.hbm [shape: f32[8,32], index: 4, kind: output, shape index: {0}]
  %s5 = inlined_call_operand.hbm [shape: f32[8,8], index: 5, kind: output, shape index: {1}]
  %6 = xla_tuple %s4, %s5
  %s7 = sld [smem:[#allocation0]]
  $region50: #{tpu_custom_call.1} parent=0
    _
  %s9 = ssub.s32 1, %s7
  %s10 = scalar_select 0, %s9, %s7
  $region1: #{tpu_custom_call.1} parent=0
    #allocation3 [shape = 'u8[2048]{0}', space=vmem, size = 0x800, scoped, tag = 'input window, operand 0, single buffered']
    #allocation4 [shape = 's32[1]{0}', space=sflag, size = 0x4, scoped, tag = 'scoped memory for tpu_custom_call.1']
    #allocation5 [shape = 's32[1]{0}', space=sflag, size = 0x4, scoped, tag = 'scoped memory for tpu_custom_call.1']
    #allocation6 [shape = 'u8[2048]{0}', space=vmem, size = 0x800, scoped, tag = 'input window, operand 1, single buffered']
    #allocation7 [shape = 's32[1]{0}', space=sflag, size = 0x4, scoped, tag = 'scoped memory for tpu_custom_call.1']
    #allocation8 [shape = 'u8[2048]{0}', space=vmem, size = 0x800, scoped, tag = 'input window, operand 2, single buffered']
    #allocation9 [shape = 'u8[8192]{0}', space=vmem, size = 0x2000, scoped, tag = 'input window, operand 3, single buffered']
    #allocation10 [shape = 's32[1]{0}', space=sflag, size = 0x4, scoped, tag = 'scoped memory for tpu_custom_call.1']
    #allocation11 [shape = 'u8[4096]{0}', space=vmem, size = 0x1000, scoped, tag = 'output window, operand 0, single buffered']
    #allocation12 [shape = 'u8[4096]{0}', space=vmem, size = 0x1000, scoped, tag = 'output window, operand 1, single buffered']
    #allocation13 [shape = 's32[1]{0}', space=sflag, size = 0x4, scoped, tag = 'scoped memory for tpu_custom_call.1']
    %11 = vsyncpa [#allocation4], 0
    %12 = vsyncpa [#allocation7], 0
    %13 = vsyncpa [#allocation10], 0
    %14 = vsyncpa [#allocation5], 0
    %15 = vsyncpa [#allocation13], 0
    // Predicated region
    $region2: #{tpu_custom_call.1} parent=1 // pred_check
      _
    $region3: #{tpu_custom_call.1} parent=1 // pred_check_branch
      %17 = sbr.rel (0) target = $region5
    $region4: #{tpu_custom_call.1} parent=1 // pred_region
      %s19 = ssub.s32 64, 64
      %20 = vsyncadd [#allocation4], %s19
      %s22 = sshll.u32 [#allocation3], 4
      %s23 = int_to_ptr.vmem [resolvable:$true] %s22
      %25 = dma.hbm_to_vmem [thread:$0]  %s0, 64, %s23, [#allocation4]
    $region5: #{tpu_custom_call.1} parent=1 // pred_fallthru
      _
    // Predicated region
    $region6: #{tpu_custom_call.1} parent=1 // pred_check
      _
    $region7: #{tpu_custom_call.1} parent=1 // pred_check_branch
      %27 = sbr.rel (0) target = $region9
    $region8: #{tpu_custom_call.1} parent=1 // pred_region
      %s29 = ssub.s32 64, 64
      %30 = vsyncadd [#allocation7], %s29
      %s32 = sshll.u32 [#allocation6], 4
      %s33 = int_to_ptr.vmem [resolvable:$true] %s32
      %35 = dma.hbm_to_vmem [thread:$0]  %s1, 64, %s33, [#allocation7]
    $region9: #{tpu_custom_call.1} parent=1 // pred_fallthru
      _
    // Predicated region
    $region10: #{tpu_custom_call.1} parent=1 // pred_check
      _
    $region11: #{tpu_custom_call.1} parent=1 // pred_check_branch
      %37 = sbr.rel (0) target = $region13
    $region12: #{tpu_custom_call.1} parent=1 // pred_region
      %s39 = ssub.s32 64, 64
      %40 = vsyncadd [#allocation7], %s39
      %s42 = sshll.u32 [#allocation8], 4
      %s43 = int_to_ptr.vmem [resolvable:$true] %s42
      %45 = dma.hbm_to_vmem [thread:$0]  %s2, 64, %s43, [#allocation7]
    $region13: #{tpu_custom_call.1} parent=1 // pred_fallthru
      _
    // Predicated region
    $region14: #{tpu_custom_call.1} parent=1 // pred_check
      _
    $region15: #{tpu_custom_call.1} parent=1 // pred_check_branch
      %47 = sbr.rel (0) target = $region17
    $region16: #{tpu_custom_call.1} parent=1 // pred_region
      %s49 = ssub.s32 256, 256
      %50 = vsyncadd [#allocation10], %s49
      %s51 = sshll.u32 [#allocation9], 4
      %s52 = int_to_ptr.vmem [resolvable:$true] %s51
      %57 = dma.hbm_to_vmem [thread:$0]  %s3, 256, %s52, [#allocation10], 64, 64, 4
    $region17: #{tpu_custom_call.1} parent=1 // pred_fallthru
      _
    // Predicated region
    $region18: #{tpu_custom_call.1} parent=1 // pred_check
      _
    $region19: #{tpu_custom_call.1} parent=1 // pred_check_branch
      %59 = sbr.rel (0) target = $region21
    $region20: #{tpu_custom_call.1} parent=1 // pred_region
      %60 = dma.done [#allocation4], 64
    $region21: #{tpu_custom_call.1} parent=1 // pred_fallthru
      _
    // Predicated region
    $region22: #{tpu_custom_call.1} parent=1 // pred_check
      _
    $region23: #{tpu_custom_call.1} parent=1 // pred_check_branch
      %62 = sbr.rel (0) target = $region25
    $region24: #{tpu_custom_call.1} parent=1 // pred_region
      %63 = dma.done [#allocation7], 64
    $region25: #{tpu_custom_call.1} parent=1 // pred_fallthru
      _
    // Predicated region
    $region26: #{tpu_custom_call.1} parent=1 // pred_check
      _
    $region27: #{tpu_custom_call.1} parent=1 // pred_check_branch
      %65 = sbr.rel (0) target = $region29
    $region28: #{tpu_custom_call.1} parent=1 // pred_region
      %66 = dma.done [#allocation7], 64
    $region29: #{tpu_custom_call.1} parent=1 // pred_fallthru
      _
    // Predicated region
    $region30: #{tpu_custom_call.1} parent=1 // pred_check
      _
    $region31: #{tpu_custom_call.1} parent=1 // pred_check_branch
      %68 = sbr.rel (0) target = $region33
    $region32: #{tpu_custom_call.1} parent=1 // pred_region
      %69 = dma.done [#allocation10], 256
    $region33: #{tpu_custom_call.1} parent=1 // pred_fallthru
      _
    %v71 = vld [vmem:[#allocation3] sm:$0xf]
    %v72 = vld [vmem:[#allocation6] sm:$0xf]
    %v73 = vld [vmem:[#allocation8] sm:$0xf]
    %vm74 = vcmask 130048
    %v76 = vsel %vm74, %v71, 0
    %v79 = vsel %vm74, %v72, 0
    %81 = vmatprep.subr.bf16.mxu0 0
    %82 = vmatpush1.bf16.xpose.msra.mxu0 0
    %83 = vmatprep.subr.bf16.mxu0 0
    %84 = vmatpush1.bf16.xpose.msra.mxu0 0
    %85 = vmatprep.subr.bf16.mxu0 0
    %86 = vmatpush1.bf16.xpose.msra.mxu0 0
    %87 = vmatprep.subr.bf16.mxu0 0
    %88 = vmatpush1.bf16.xpose.msra.mxu0 0
    %89 = vmatprep.subr.bf16.mxu0 0
    %90 = vmatpush1.bf16.xpose.msra.mxu0 0
    %91 = vmatprep.subr.bf16.mxu0 0
    %92 = vmatpush1.bf16.xpose.msra.mxu0 0
    %93 = vmatprep.subr.bf16.mxu0 0
    %94 = vmatpush1.bf16.xpose.msra.mxu0 0
    %95 = vmatprep.subr.bf16.mxu0 0
    %96 = vmatpush1.bf16.xpose.msra.mxu0 %v79
    %97 = vmatprep.subr.bf16.mxu0 0
    %98 = vmatpush2.bf16.xpose.msra.mxu0 0
    %99 = vmatprep.subr.bf16.mxu0 0
    %100 = vmatpush2.bf16.xpose.msra.mxu0 0
    %101 = vmatprep.subr.bf16.mxu0 0
    %102 = vmatpush2.bf16.xpose.msra.mxu0 0
    %103 = vmatprep.subr.bf16.mxu0 0
    %104 = vmatpush2.bf16.xpose.msra.mxu0 0
    %105 = vmatprep.subr.bf16.mxu0 0
    %106 = vmatpush2.bf16.xpose.msra.mxu0 0
    %107 = vmatprep.subr.bf16.mxu0 0
    %108 = vmatpush2.bf16.xpose.msra.mxu0 0
    %109 = vmatprep.subr.bf16.mxu0 0
    %110 = vmatpush2.bf16.xpose.msra.mxu0 0
    %111 = vmatprep.subr.bf16.mxu0 0
    %112 = vmatpush2.bf16.xpose.msra.mxu0 0
    %113 = vmatprep.mubr.bf16.mxu0 0
    %114 = vmatmul.mubr.bf16.gmra.mxu0 %v76
    %v115 = vpop.f32.mrf.mxu0
    %v116 = vadd.f32 0.0, %v115
    %v117 = vpop.f32.mrf.mxu0
    %v118 = vpop.f32.mrf.mxu0
    %v119 = vpop.f32.mrf.mxu0
    %120 = vdwg.mxu0
    %vm121 = vcmask 64512
    %v122 = vsel %vm121, %v116, -inf
    %123 = vmax.xlane.f32.xlu0 %v122
    %v124 = vpop.xlane.xlu0 %123
    %v125 = vsub.f32 %v116, %v124
    %v126 = vmul.f32 %v125, 1.442695
    %v127 = vpow.pop %v126
    %v128 = vsel %vm121, %v127, 0.0
    %129 = vadd.xlane.f32.xlu0 %v128
    %v130 = vpop.xlane.xlu0 %129
    %v131 = vrcp.pop %v130
    %v132 = vmul.f32 %v127, %v131
    %v133 = vpack.c.bf16 %v132, %v132
    %v135 = vsel %vm121, %v133, 0
    %vm137 = vcmask 1043456
    %v139 = vsel %vm137, %v73, 0
    %141 = vmatprep.subr.bf16.mxu0 0
    %142 = vmatpush1.bf16.msra.mxu0 0
    %143 = vmatprep.subr.bf16.mxu0 0
    %144 = vmatpush1.bf16.msra.mxu0 0
    %145 = vmatprep.subr.bf16.mxu0 0
    %146 = vmatpush1.bf16.msra.mxu0 0
    %147 = vmatprep.subr.bf16.mxu0 0
    %148 = vmatpush1.bf16.msra.mxu0 0
    %149 = vmatprep.subr.bf16.mxu0 0
    %150 = vmatpush1.bf16.msra.mxu0 0
    %151 = vmatprep.subr.bf16.mxu0 0
    %152 = vmatpush1.bf16.msra.mxu0 0
    %153 = vmatprep.subr.bf16.mxu0 0
    %154 = vmatpush1.bf16.msra.mxu0 0
    %155 = vmatprep.subr.bf16.mxu0 0
    %156 = vmatpush1.bf16.msra.mxu0 %v139
    %157 = vmatprep.subr.bf16.mxu0 0
    %158 = vmatpush2.bf16.msra.mxu0 0
    %159 = vmatprep.subr.bf16.mxu0 0
    %160 = vmatpush2.bf16.msra.mxu0 0
    %161 = vmatprep.subr.bf16.mxu0 0
    %162 = vmatpush2.bf16.msra.mxu0 0
    %163 = vmatprep.subr.bf16.mxu0 0
    %164 = vmatpush2.bf16.msra.mxu0 0
    %165 = vmatprep.subr.bf16.mxu0 0
    %166 = vmatpush2.bf16.msra.mxu0 0
    %167 = vmatprep.subr.bf16.mxu0 0
    %168 = vmatpush2.bf16.msra.mxu0 0
    %169 = vmatprep.subr.bf16.mxu0 0
    %170 = vmatpush2.bf16.msra.mxu0 0
    %171 = vmatprep.subr.bf16.mxu0 0
    %172 = vmatpush2.bf16.msra.mxu0 0
    %173 = vmatprep.mubr.bf16.mxu0 0
    %174 = vmatmul.mubr.bf16.gmra.mxu0 %v135
    %v175 = vpop.f32.mrf.mxu0
    %v176 = vadd.f32 0.0, %v175
    %v177 = vpop.f32.mrf.mxu0
    %v178 = vpop.f32.mrf.mxu0
    %v179 = vpop.f32.mrf.mxu0
    %180 = vdwg.mxu0
    %181 = vst.msk [vmem:[#allocation2] sm:$0xff] %vm74, %v176
    %v182 = vld [vmem:[#allocation3] sm:$0xf]
    %v183 = vld [vmem:[#allocation6] sm:$0xf]
    %v184 = vld [vmem:[#allocation8] sm:$0xf]
    %v186 = vunpack.c.l.b16 %v182
    %v187 = vpack.c.b16 %v186, %v186
    %188 = vrot.lane.b32.xlu0 %v187, 112
    %v189 = vpop.permute.xlu0 %188
    %v191 = vunpack.c.l.b16 %v183
    %v192 = vpack.c.b16 %v191, %v191
    %193 = vrot.lane.b32.xlu0 %v192, 112
    %v194 = vpop.permute.xlu0 %193
    %v196 = vsel %vm74, %v189, 0
    %v199 = vsel %vm74, %v194, 0
    %201 = vmatprep.subr.bf16.mxu0 0
    %202 = vmatpush1.bf16.xpose.msra.mxu0 0
    %203 = vmatprep.subr.bf16.mxu0 0
    %204 = vmatpush1.bf16.xpose.msra.mxu0 0
    %205 = vmatprep.subr.bf16.mxu0 0
    %206 = vmatpush1.bf16.xpose.msra.mxu0 0
    %207 = vmatprep.subr.bf16.mxu0 0
    %208 = vmatpush1.bf16.xpose.msra.mxu0 0
    %209 = vmatprep.subr.bf16.mxu0 0
    %210 = vmatpush1.bf16.xpose.msra.mxu0 0
    %211 = vmatprep.subr.bf16.mxu0 0
    %212 = vmatpush1.bf16.xpose.msra.mxu0 0
    %213 = vmatprep.subr.bf16.mxu0 0
    %214 = vmatpush1.bf16.xpose.msra.mxu0 0
    %215 = vmatprep.subr.bf16.mxu0 0
    %216 = vmatpush1.bf16.xpose.msra.mxu0 %v199
    %217 = vmatprep.subr.bf16.mxu0 0
    %218 = vmatpush2.bf16.xpose.msra.mxu0 0
    %219 = vmatprep.subr.bf16.mxu0 0
    %220 = vmatpush2.bf16.xpose.msra.mxu0 0
    %221 = vmatprep.subr.bf16.mxu0 0
    %222 = vmatpush2.bf16.xpose.msra.mxu0 0
    %223 = vmatprep.subr.bf16.mxu0 0
    %224 = vmatpush2.bf16.xpose.msra.mxu0 0
    %225 = vmatprep.subr.bf16.mxu0 0
    %226 = vmatpush2.bf16.xpose.msra.mxu0 0
    %227 = vmatprep.subr.bf16.mxu0 0
    %228 = vmatpush2.bf16.xpose.msra.mxu0 0
    %229 = vmatprep.subr.bf16.mxu0 0
    %230 = vmatpush2.bf16.xpose.msra.mxu0 0
    %231 = vmatprep.subr.bf16.mxu0 0
    %232 = vmatpush2.bf16.xpose.msra.mxu0 0
    %233 = vmatprep.mubr.bf16.mxu0 0
    %234 = vmatmul.mubr.bf16.gmra.mxu0 %v196
    %v235 = vpop.f32.mrf.mxu0
    %v236 = vadd.f32 0.0, %v235
    %v237 = vpop.f32.mrf.mxu0
    %v238 = vpop.f32.mrf.mxu0
    %v239 = vpop.f32.mrf.mxu0
    %240 = vdwg.mxu0
    %v241 = vsel %vm121, %v236, -inf
    %242 = vmax.xlane.f32.xlu0 %v241
    %v243 = vpop.xlane.xlu0 %242
    %v244 = vsub.f32 %v236, %v243
    %v245 = vmul.f32 %v244, 1.442695
    %v246 = vpow.pop %v245
    %v247 = vsel %vm121, %v246, 0.0
    %248 = vadd.xlane.f32.xlu0 %v247
    %v249 = vpop.xlane.xlu0 %248
    %v250 = vrcp.pop %v249
    %v251 = vmul.f32 %v246, %v250
    %v252 = vpack.c.bf16 %v251, %v251
    %v254 = vunpack.c.l.b16 %v184
    %v255 = vpack.c.b16 %v254, %v254
    %256 = vrot.lane.b32.xlu0 %v255, 112
    %v257 = vpop.permute.xlu0 %256
    %v259 = vsel %vm121, %v252, 0
    %v262 = vsel %vm137, %v257, 0
    %264 = vmatprep.subr.bf16.mxu0 0
    %265 = vmatpush1.bf16.msra.mxu0 0
    %266 = vmatprep.subr.bf16.mxu0 0
    %267 = vmatpush1.bf16.msra.mxu0 0
    %268 = vmatprep.subr.bf16.mxu0 0
    %269 = vmatpush1.bf16.msra.mxu0 0
    %270 = vmatprep.subr.bf16.mxu0 0
    %271 = vmatpush1.bf16.msra.mxu0 0
    %272 = vmatprep.subr.bf16.mxu0 0
    %273 = vmatpush1.bf16.msra.mxu0 0
    %274 = vmatprep.subr.bf16.mxu0 0
    %275 = vmatpush1.bf16.msra.mxu0 0
    %276 = vmatprep.subr.bf16.mxu0 0
    %277 = vmatpush1.bf16.msra.mxu0 0
    %278 = vmatprep.subr.bf16.mxu0 0
    %279 = vmatpush1.bf16.msra.mxu0 %v262
    %280 = vmatprep.subr.bf16.mxu0 0
    %281 = vmatpush2.bf16.msra.mxu0 0
    %282 = vmatprep.subr.bf16.mxu0 0
    %283 = vmatpush2.bf16.msra.mxu0 0
    %284 = vmatprep.subr.bf16.mxu0 0
    %285 = vmatpush2.bf16.msra.mxu0 0
    %286 = vmatprep.subr.bf16.mxu0 0
    %287 = vmatpush2.bf16.msra.mxu0 0
    %288 = vmatprep.subr.bf16.mxu0 0
    %289 = vmatpush2.bf16.msra.mxu0 0
    %290 = vmatprep.subr.bf16.mxu0 0
    %291 = vmatpush2.bf16.msra.mxu0 0
    %292 = vmatprep.subr.bf16.mxu0 0
    %293 = vmatpush2.bf16.msra.mxu0 0
    %294 = vmatprep.subr.bf16.mxu0 0
    %295 = vmatpush2.bf16.msra.mxu0 0
    %296 = vmatprep.mubr.bf16.mxu0 0
    %297 = vmatmul.mubr.bf16.gmra.mxu0 %v259
    %v298 = vpop.f32.mrf.mxu0
    %v299 = vadd.f32 0.0, %v298
    %v300 = vpop.f32.mrf.mxu0
    %v301 = vpop.f32.mrf.mxu0
    %v302 = vpop.f32.mrf.mxu0
    %303 = vdwg.mxu0
    %305 = vrot.lane.b32.xlu0 %v299, 16
    %v306 = vpop.permute.xlu0 %305
    %vm308 = vcmask 261248
    %309 = vst.msk [vmem:[#allocation2] sm:$0xff] %vm308, %v306
    %v310 = vld [vmem:[#allocation2] sm:$0xff]
    %v311 = vpack.c.bf16 %v310, %v310
    %v312 = vld [vmem:[#allocation9] sm:$0xf]
    %v313 = vld [vmem:[#allocation9 + $0x4] sm:$0xf]
    %v314 = vld [vmem:[#allocation9 + $0x8] sm:$0xf]
    %v315 = vld [vmem:[#allocation9 + $0xc] sm:$0xf]
    %v320 = vunpack.c.l.b16 %v312
    %v321 = vunpack.c.l.b16 %v313
    %v322 = vunpack.c.l.b16 %v314
    %v323 = vunpack.c.l.b16 %v315
    %v324 = vpack.c.b16 %v321, %v320
    %v325 = vpack.c.b16 %v323, %v322
    %vm328 = vcmask 261120
    %v330 = vsel %vm328, %v311, 0
    %332 = vmatprep.subr.bf16.mxu0 0
    %333 = vmatpush1.bf16.msra.mxu0 0
    %334 = vmatprep.subr.bf16.mxu0 0
    %335 = vmatpush1.bf16.msra.mxu0 0
    %336 = vmatprep.subr.bf16.mxu0 0
    %337 = vmatpush1.bf16.msra.mxu0 0
    %338 = vmatprep.subr.bf16.mxu0 0
    %339 = vmatpush1.bf16.msra.mxu0 0
    %340 = vmatprep.subr.bf16.mxu0 0
    %341 = vmatpush1.bf16.msra.mxu0 0
    %342 = vmatprep.subr.bf16.mxu0 0
    %343 = vmatpush1.bf16.msra.mxu0 0
    %344 = vmatprep.subr.bf16.mxu0 0
    %345 = vmatpush1.bf16.msra.mxu0 %v325
    %346 = vmatprep.subr.bf16.mxu0 0
    %347 = vmatpush1.bf16.msra.mxu0 %v324
    %348 = vmatprep.subr.bf16.mxu0 0
    %349 = vmatpush2.bf16.msra.mxu0 0
    %350 = vmatprep.subr.bf16.mxu0 0
    %351 = vmatpush2.bf16.msra.mxu0 0
    %352 = vmatprep.subr.bf16.mxu0 0
    %353 = vmatpush2.bf16.msra.mxu0 0
    %354 = vmatprep.subr.bf16.mxu0 0
    %355 = vmatpush2.bf16.msra.mxu0 0
    %356 = vmatprep.subr.bf16.mxu0 0
    %357 = vmatpush2.bf16.msra.mxu0 0
    %358 = vmatprep.subr.bf16.mxu0 0
    %359 = vmatpush2.bf16.msra.mxu0 0
    %360 = vmatprep.subr.bf16.mxu0 0
    %361 = vmatpush2.bf16.msra.mxu0 0
    %362 = vmatprep.subr.bf16.mxu0 0
    %363 = vmatpush2.bf16.msra.mxu0 0
    %364 = vmatprep.mubr.bf16.mxu0 0
    %365 = vmatmul.mubr.bf16.gmra.mxu0 %v330
    %v366 = vpop.f32.mrf.mxu0
    %v367 = vadd.f32 0.0, %v366
    %v368 = vpop.f32.mrf.mxu0
    %v369 = vpop.f32.mrf.mxu0
    %v370 = vpop.f32.mrf.mxu0
    %371 = vdwg.mxu0
    %372 = vst.msk [vmem:[#allocation11] sm:$0xff] %vm328, %v367
    %373 = vst.msk [vmem:[#allocation12] sm:$0xff] %vm121, %v251
    // Predicated region
    $region34: #{tpu_custom_call.1} parent=1 // pred_check
      _
    $region35: #{tpu_custom_call.1} parent=1 // pred_check_branch
      %375 = sbr.rel (0) target = $region37
    $region36: #{tpu_custom_call.1} parent=1 // pred_region
      %s377 = ssub.s32 128, 128
      %378 = vsyncadd [#allocation5], %s377
      %s380 = sshll.u32 [#allocation11], 4
      %s381 = int_to_ptr.vmem [resolvable:$true] %s380
      %383 = dma.vmem_to_hbm [thread:$0]  %s381, 128, %s4, [#allocation5]
    $region37: #{tpu_custom_call.1} parent=1 // pred_fallthru
      _
    // Predicated region
    $region38: #{tpu_custom_call.1} parent=1 // pred_check
      _
    $region39: #{tpu_custom_call.1} parent=1 // pred_check_branch
      %385 = sbr.rel (0) target = $region41
    $region40: #{tpu_custom_call.1} parent=1 // pred_region
      %s387 = ssub.s32 128, 128
      %388 = vsyncadd [#allocation13], %s387
      %s390 = sshll.u32 [#allocation12], 4
      %s391 = int_to_ptr.vmem [resolvable:$true] %s390
      %393 = dma.vmem_to_hbm [thread:$0]  %s391, 128, %s5, [#allocation13]
    $region41: #{tpu_custom_call.1} parent=1 // pred_fallthru
      _
    // Predicated region
    $region42: #{tpu_custom_call.1} parent=1 // pred_check
      _
    $region43: #{tpu_custom_call.1} parent=1 // pred_check_branch
      %395 = sbr.rel (0) target = $region45
    $region44: #{tpu_custom_call.1} parent=1 // pred_region
      %396 = dma.done [#allocation5], 128
    $region45: #{tpu_custom_call.1} parent=1 // pred_fallthru
      _
    // Predicated region
    $region46: #{tpu_custom_call.1} parent=1 // pred_check
      _
    $region47: #{tpu_custom_call.1} parent=1 // pred_check_branch
      %398 = sbr.rel (0) target = $region49
    $region48: #{tpu_custom_call.1} parent=1 // pred_region
      %399 = dma.done [#allocation13], 128
    $region49: #{tpu_custom_call.1} parent=1 // pred_fallthru
      _
    %400 = vsyncpa [#allocation4], 1
    %401 = vsyncpa [#allocation7], 1
    %402 = vsyncpa [#allocation10], 1
    %403 = vsyncpa [#allocation5], 1
    %404 = vsyncpa [#allocation13], 1

</llo_original>
